<compile_context>
chip_gen: v5e
topology: v5e:2x2
jax: 0.10.0
libtpu: 0.0.40
codegen_flags: <defaults>
</compile_context>

<pallas_src>
import math

import jax
import jax.numpy as jnp
from jax.experimental import pallas as pl
from jax.experimental.pallas import tpu as pltpu  # noqa: F401  (TPU backend)


def blinking_encoder_kernel(tok_ref, inv_ref, emb0_ref, emb1_ref,
                            l_ref, div_ref, phase_ref, out_ref):
    """All refs are lane-dense: last dim = L*D (multiple of 128), flat index l*D + d.

    tok_ref   : (B, L*D) int32   token id, broadcast over d
    inv_ref   : (B, L*D) float32 1/framerate_ratio, broadcast over (l, d)
    emb0_ref  : (1, L*D) float32 embedding row 0, tiled over l
    emb1_ref  : (1, L*D) float32 embedding row 1, tiled over l
    l_ref     : (1, L*D) float32 position index l, broadcast over d
    div_ref   : (1, L*D) float32 exp(2*(d//2) * -(ln(10000)/D)), tiled over l
    phase_ref : (1, L*D) float32 (d % 2) * pi/2, tiled over l
    out_ref   : (B, L*D) float32
    """
    # Embedding(2, D) lookup as an exact select (vocab size is 2).
    emb = jnp.where(tok_ref[...] != 0, emb1_ref[...], emb0_ref[...])

    # Fractional positional encoding, one sin per element:
    #   pos   = (1/framerate_ratio) * l            (same product as the reference)
    #   angle = pos * div + phase                  phase in {0, pi/2}
    #   pe    = sin(angle)  == sin(pos*div) for even d, cos(pos*div) for odd d
    pos = inv_ref[...] * l_ref[...]
    angle = pos * div_ref[...] + phase_ref[...]
    out_ref[...] = (emb + jnp.sin(angle)).astype(out_ref.dtype)


def blinking_encoder(data, mask, framerate_ratio, emb_table):
    """data: (B, L) int tokens in {0,1}; mask unused (matches PyTorch forward);
    framerate_ratio: (B,) float32; emb_table: (2, D) float32. Returns (B, L, D) f32."""
    del mask  # BlinkingEncoder.forward ignores the mask
    B, L = data.shape
    D = emb_table.shape[1]
    LD = L * D  # 16 * 32 = 512, a multiple of 128 -> lane-dense layout
    f32 = jnp.float32

    # ---- grid-invariant tables, computed once outside the kernel (tiny) ----
    d_idx = jnp.arange(D, dtype=jnp.int32)
    div_d = jnp.exp((2.0 * (d_idx // 2).astype(f32)) * (-(math.log(10000.0) / D)))  # (D,)
    phase_d = (d_idx % 2).astype(f32) * (math.pi / 2.0)                              # (D,)
    l_idx = jnp.arange(L, dtype=f32)                                                 # (L,)

    # Flat (1, L*D) layout, index = l*D + d.
    div_f = jnp.broadcast_to(div_d[None, :], (L, D)).reshape(1, LD)
    phase_f = jnp.broadcast_to(phase_d[None, :], (L, D)).reshape(1, LD)
    l_f = jnp.broadcast_to(l_idx[:, None], (L, D)).reshape(1, LD)
    emb0_f = jnp.broadcast_to(emb_table[0].astype(f32)[None, :], (L, D)).reshape(1, LD)
    emb1_f = jnp.broadcast_to(emb_table[1].astype(f32)[None, :], (L, D)).reshape(1, LD)

    # Per-batch inputs, pre-broadcast to the same lane-dense flat layout.
    tok_f = jnp.broadcast_to(data.astype(jnp.int32)[:, :, None], (B, L, D)).reshape(B, LD)
    inv_f = jnp.broadcast_to((1.0 / framerate_ratio.astype(f32))[:, None, None],
                             (B, L, D)).reshape(B, LD)

    # Single invocation (no grid): whole problem (~30 KB of operands) lives in
    # VMEM; no per-step pipeline overhead, no per-batch SMEM scalar path.
    out_flat = pl.pallas_call(
        blinking_encoder_kernel,
        out_shape=jax.ShapeDtypeStruct((B, LD), f32),
    )(tok_f, inv_f, emb0_f, emb1_f, l_f, div_f, phase_f)

    return out_flat.reshape(B, L, D)


def reference(data, framerate_ratio, emb_table):
    """Pure-JAX mirror of the PyTorch forward, for correctness checking."""
    B, L = data.shape
    D = emb_table.shape[1]
    emb = emb_table[data.astype(jnp.int32)]                               # (B, L, D)
    pos = jnp.arange(L, dtype=jnp.float32)[None, :, None] / framerate_ratio[:, None, None]
    div_term = jnp.exp(jnp.arange(0, D, 2, dtype=jnp.float32) * (-(math.log(10000.0) / D)))
    ang = pos * div_term[None, None, :]                                   # (B, L, D/2)
    pe = jnp.zeros((B, L, D), jnp.float32)
    pe = pe.at[:, :, 0::2].set(jnp.sin(ang))
    pe = pe.at[:, :, 1::2].set(jnp.cos(ang))
    return emb + pe


if __name__ == "__main__":
    # Small shapes consistent with the module:
    #   B=2, latent_dim D=32, max_data_length L = MAX_VIDEO_FPS * seconds_per_window = 16
    B, L, D = 2, 16, 32

    key = jax.random.PRNGKey(0)
    k_emb, k_tok, k_fr = jax.random.split(key, 3)

    # Deterministic synthetic parameters: Embedding(2, D) weights ~ N(0, 1)
    emb_table = jax.random.normal(k_emb, (2, D), dtype=jnp.float32)

    # Inputs: binary blink tokens, an (unused) mask, per-batch framerate ratio
    data = jax.random.bernoulli(k_tok, 0.5, (B, L)).astype(jnp.int32)
    mask = jnp.ones((B, L), dtype=jnp.float32)
    framerate_ratio = jax.random.uniform(k_fr, (B,), jnp.float32, 0.5, 2.0)

    out = blinking_encoder(data, mask, framerate_ratio, emb_table)
    out = jax.block_until_ready(out)

    ref = reference(data, framerate_ratio, emb_table)
    assert out.shape == (B, L, D) and out.dtype == jnp.float32
    # Tolerance note: the kernel computes cos(x) as sin(x + pi/2) (one EUP op per
    # element); this differs from the sin/cos pair by ~ulp(angle) ≈ 1e-6 here.
    assert jnp.allclose(out, ref, atol=2e-5, rtol=2e-5), "mismatch vs pure-JAX reference"

    print("KERNEL_OK")
</pallas_src>

<mosaic_0001>
module attributes {stable_mosaic.version = 11 : i64} {
  func.func @blinking_encoder_kernel(%arg0: memref<2x512xi32, #tpu.memory_space<vmem>>, %arg1: memref<2x512xf32, #tpu.memory_space<vmem>>, %arg2: memref<1x512xf32, #tpu.memory_space<vmem>>, %arg3: memref<1x512xf32, #tpu.memory_space<vmem>>, %arg4: memref<1x512xf32, #tpu.memory_space<vmem>>, %arg5: memref<1x512xf32, #tpu.memory_space<vmem>>, %arg6: memref<1x512xf32, #tpu.memory_space<vmem>>, %arg7: memref<2x512xf32, #tpu.memory_space<vmem>>) attributes {dimension_semantics = [], scalar_prefetch = 0 : i64, scratch_operands = 0 : i64, tpu.core_type = #tpu.core_type<tc>} {
    %c0 = arith.constant 0 : index
    %c0_0 = arith.constant 0 : index
    %0 = vector.load %arg0[%c0, %c0_0] : memref<2x512xi32, #tpu.memory_space<vmem>>, vector<2x512xi32>
    %c0_i32 = arith.constant 0 : i32
    %1 = vector.broadcast %c0_i32 : i32 to vector<2x512xi32>
    %2 = arith.cmpi ne, %0, %1 : vector<2x512xi32>
    %c0_1 = arith.constant 0 : index
    %c0_2 = arith.constant 0 : index
    %3 = vector.load %arg3[%c0_1, %c0_2] : memref<1x512xf32, #tpu.memory_space<vmem>>, vector<1x512xf32>
    %c0_3 = arith.constant 0 : index
    %c0_4 = arith.constant 0 : index
    %4 = vector.load %arg2[%c0_3, %c0_4] : memref<1x512xf32, #tpu.memory_space<vmem>>, vector<1x512xf32>
    %5 = vector.shape_cast %3 : vector<1x512xf32> to vector<1x512xf32>
    %6 = vector.broadcast %5 : vector<1x512xf32> to vector<2x512xf32>
    %7 = vector.shape_cast %4 : vector<1x512xf32> to vector<1x512xf32>
    %8 = vector.broadcast %7 : vector<1x512xf32> to vector<2x512xf32>
    %9 = arith.select %2, %6, %8 : vector<2x512xi1>, vector<2x512xf32>
    %c0_5 = arith.constant 0 : index
    %c0_6 = arith.constant 0 : index
    %10 = vector.load %arg1[%c0_5, %c0_6] : memref<2x512xf32, #tpu.memory_space<vmem>>, vector<2x512xf32>
    %c0_7 = arith.constant 0 : index
    %c0_8 = arith.constant 0 : index
    %11 = vector.load %arg4[%c0_7, %c0_8] : memref<1x512xf32, #tpu.memory_space<vmem>>, vector<1x512xf32>
    %12 = vector.broadcast %11 : vector<1x512xf32> to vector<2x512xf32>
    %13 = arith.mulf %10, %12 : vector<2x512xf32>
    %c0_9 = arith.constant 0 : index
    %c0_10 = arith.constant 0 : index
    %14 = vector.load %arg5[%c0_9, %c0_10] : memref<1x512xf32, #tpu.memory_space<vmem>>, vector<1x512xf32>
    %15 = vector.broadcast %14 : vector<1x512xf32> to vector<2x512xf32>
    %16 = arith.mulf %13, %15 : vector<2x512xf32>
    %c0_11 = arith.constant 0 : index
    %c0_12 = arith.constant 0 : index
    %17 = vector.load %arg6[%c0_11, %c0_12] : memref<1x512xf32, #tpu.memory_space<vmem>>, vector<1x512xf32>
    %18 = vector.broadcast %17 : vector<1x512xf32> to vector<2x512xf32>
    %19 = arith.addf %16, %18 : vector<2x512xf32>
    %20 = math.sin %19 : vector<2x512xf32>
    %21 = arith.addf %9, %20 : vector<2x512xf32>
    %c0_13 = arith.constant 0 : index
    %c0_14 = arith.constant 0 : index
    %22 = vector.load %arg7[%c0_13, %c0_14] : memref<2x512xf32, #tpu.memory_space<vmem>>, vector<2x512xf32>
    tpu.vector_store %arg7[%c0_13, %c0_14], %21 {strides = array<i32>} : memref<2x512xf32, #tpu.memory_space<vmem>>, vector<2x512xf32>,
    return
  }
}

</mosaic_0001>

<llo_original>
// kernel: tpu_custom_call.1
$region0: #{tpu_custom_call.1}
  #allocation0 [shape = 'u32[]', space=smem, size = 0x4, offset = 0x4, fixed_abs, tag = 'smem constant byte address 0x4 - core index']
  #allocation1 [shape = 'u32[72,128]{1,0:T(1,128)}', space=vmem, size = 0x9000, scoped, tag = 'internal scratch']
  %s0 = inlined_call_operand.hbm [shape: s32[2,512], index: 0, kind: input, shape index: {}]
  %s1 = inlined_call_operand.hbm [shape: f32[2,512], index: 1, kind: input, shape index: {}]
  %s2 = inlined_call_operand.hbm [shape: f32[1,512], index: 2, kind: input, shape index: {}]
  %s3 = inlined_call_operand.hbm [shape: f32[1,512], index: 3, kind: input, shape index: {}]
  %s4 = inlined_call_operand.hbm [shape: f32[1,512], index: 4, kind: input, shape index: {}]
  %s5 = inlined_call_operand.vmem [shape: f32[1,512], index: 5, kind: input, shape index: {}]
  %s6 = inlined_call_operand.hbm [shape: f32[1,512], index: 6, kind: input, shape index: {}]
  %s7 = inlined_call_operand.hbm [shape: f32[2,512], index: 7, kind: output, shape index: {}]
  %s8 = sld [smem:[#allocation0]]
  $region62: #{tpu_custom_call.1} parent=0
    _
  %s10 = ssub.s32 1, %s8
  %s11 = scalar_select 0, %s10, %s8
  $region1: #{tpu_custom_call.1} parent=0
    #allocation2 [shape = 'u8[4096]{0}', space=vmem, size = 0x1000, scoped, tag = 'input window, operand 0, single buffered']
    #allocation3 [shape = 's32[1]{0}', space=sflag, size = 0x4, scoped, tag = 'scoped memory for tpu_custom_call.1']
    #allocation4 [shape = 's32[1]{0}', space=sflag, size = 0x4, scoped, tag = 'scoped memory for tpu_custom_call.1']
    #allocation5 [shape = 'u8[4096]{0}', space=vmem, size = 0x1000, scoped, tag = 'input window, operand 1, single buffered']
    #allocation6 [shape = 's32[1]{0}', space=sflag, size = 0x4, scoped, tag = 'scoped memory for tpu_custom_call.1']
    #allocation7 [shape = 'u8[2048]{0}', space=vmem, size = 0x800, scoped, tag = 'input window, operand 2, single buffered']
    #allocation8 [shape = 'u8[2048]{0}', space=vmem, size = 0x800, scoped, tag = 'input window, operand 3, single buffered']
    #allocation9 [shape = 's32[1]{0}', space=sflag, size = 0x4, scoped, tag = 'scoped memory for tpu_custom_call.1']
    #allocation10 [shape = 'u8[2048]{0}', space=vmem, size = 0x800, scoped, tag = 'input window, operand 4, single buffered']
    #allocation11 [shape = 'u8[2048]{0}', space=vmem, size = 0x800, scoped, tag = 'input window, operand 6, single buffered']
    #allocation12 [shape = 's32[1]{0}', space=sflag, size = 0x4, scoped, tag = 'scoped memory for tpu_custom_call.1']
    #allocation13 [shape = 'u8[4096]{0}', space=vmem, size = 0x1000, scoped, tag = 'output window, operand 0, single buffered']
    %12 = vsyncpa [#allocation3], 0
    %13 = vsyncpa [#allocation6], 0
    %14 = vsyncpa [#allocation9], 0
    %15 = vsyncpa [#allocation12], 0
    %16 = vsyncpa [#allocation4], 0
    // Predicated region
    $region2: #{tpu_custom_call.1} parent=1 // pred_check
      _
    $region3: #{tpu_custom_call.1} parent=1 // pred_check_branch
      %18 = sbr.rel (0) target = $region5
    $region4: #{tpu_custom_call.1} parent=1 // pred_region
      %20 = vsyncadd [#allocation3], 0
      %s22 = sshll.u32 %s0, 4
      %s23 = int_to_ptr.hbm [resolvable:$true] %s22
      %s24 = sshll.u32 [#allocation2], 4
      %s25 = int_to_ptr.vmem [resolvable:$true] %s24
      %27 = dma.hbm_to_vmem [thread:$0]  %s23, 128, %s25, [#allocation3]
    $region5: #{tpu_custom_call.1} parent=1 // pred_fallthru
      _
    // Predicated region
    $region6: #{tpu_custom_call.1} parent=1 // pred_check
      _
    $region7: #{tpu_custom_call.1} parent=1 // pred_check_branch
      %29 = sbr.rel (0) target = $region9
    $region8: #{tpu_custom_call.1} parent=1 // pred_region
      %31 = vsyncadd [#allocation6], 0
      %s33 = sshll.u32 %s1, 4
      %s34 = int_to_ptr.hbm [resolvable:$true] %s33
      %s35 = sshll.u32 [#allocation5], 4
      %s36 = int_to_ptr.vmem [resolvable:$true] %s35
      %38 = dma.hbm_to_vmem [thread:$0]  %s34, 128, %s36, [#allocation6]
    $region9: #{tpu_custom_call.1} parent=1 // pred_fallthru
      _
    // Predicated region
    $region10: #{tpu_custom_call.1} parent=1 // pred_check
      _
    $region11: #{tpu_custom_call.1} parent=1 // pred_check_branch
      %40 = sbr.rel (0) target = $region13
    $region12: #{tpu_custom_call.1} parent=1 // pred_region
      %42 = vsyncadd [#allocation6], 0
      %s44 = sshll.u32 %s2, 4
      %s45 = int_to_ptr.hbm [resolvable:$true] %s44
      %s46 = sshll.u32 [#allocation7], 4
      %s47 = int_to_ptr.vmem [resolvable:$true] %s46
      %49 = dma.hbm_to_vmem [thread:$0]  %s45, 64, %s47, [#allocation6]
    $region13: #{tpu_custom_call.1} parent=1 // pred_fallthru
      _
    // Predicated region
    $region14: #{tpu_custom_call.1} parent=1 // pred_check
      _
    $region15: #{tpu_custom_call.1} parent=1 // pred_check_branch
      %51 = sbr.rel (0) target = $region17
    $region16: #{tpu_custom_call.1} parent=1 // pred_region
      %53 = vsyncadd [#allocation9], 0
      %s55 = sshll.u32 %s3, 4
      %s56 = int_to_ptr.hbm [resolvable:$true] %s55
      %s57 = sshll.u32 [#allocation8], 4
      %s58 = int_to_ptr.vmem [resolvable:$true] %s57
      %60 = dma.hbm_to_vmem [thread:$0]  %s56, 64, %s58, [#allocation9]
    $region17: #{tpu_custom_call.1} parent=1 // pred_fallthru
      _
    // Predicated region
    $region18: #{tpu_custom_call.1} parent=1 // pred_check
      _
    $region19: #{tpu_custom_call.1} parent=1 // pred_check_branch
      %62 = sbr.rel (0) target = $region21
    $region20: #{tpu_custom_call.1} parent=1 // pred_region
      %64 = vsyncadd [#allocation9], 0
      %s66 = sshll.u32 %s4, 4
      %s67 = int_to_ptr.hbm [resolvable:$true] %s66
      %s68 = sshll.u32 [#allocation10], 4
      %s69 = int_to_ptr.vmem [resolvable:$true] %s68
      %71 = dma.hbm_to_vmem [thread:$0]  %s67, 64, %s69, [#allocation9]
    $region21: #{tpu_custom_call.1} parent=1 // pred_fallthru
      _
    // Predicated region
    $region22: #{tpu_custom_call.1} parent=1 // pred_check
      _
    $region23: #{tpu_custom_call.1} parent=1 // pred_check_branch
      %73 = sbr.rel (0) target = $region25
    $region24: #{tpu_custom_call.1} parent=1 // pred_region
      _
    $region25: #{tpu_custom_call.1} parent=1 // pred_fallthru
      _
    // Predicated region
    $region26: #{tpu_custom_call.1} parent=1 // pred_check
      _
    $region27: #{tpu_custom_call.1} parent=1 // pred_check_branch
      %75 = sbr.rel (0) target = $region29
    $region28: #{tpu_custom_call.1} parent=1 // pred_region
      %77 = vsyncadd [#allocation12], 0
      %s79 = sshll.u32 %s6, 4
      %s80 = int_to_ptr.hbm [resolvable:$true] %s79
      %s81 = sshll.u32 [#allocation11], 4
      %s82 = int_to_ptr.vmem [resolvable:$true] %s81
      %84 = dma.hbm_to_vmem [thread:$0]  %s80, 64, %s82, [#allocation12]
    $region29: #{tpu_custom_call.1} parent=1 // pred_fallthru
      _
    // Predicated region
    $region30: #{tpu_custom_call.1} parent=1 // pred_check
      _
    $region31: #{tpu_custom_call.1} parent=1 // pred_check_branch
      %86 = sbr.rel (0) target = $region33
    $region32: #{tpu_custom_call.1} parent=1 // pred_region
      %88 = dma.done [#allocation3], 128
    $region33: #{tpu_custom_call.1} parent=1 // pred_fallthru
      _
    // Predicated region
    $region34: #{tpu_custom_call.1} parent=1 // pred_check
      _
    $region35: #{tpu_custom_call.1} parent=1 // pred_check_branch
      %90 = sbr.rel (0) target = $region37
    $region36: #{tpu_custom_call.1} parent=1 // pred_region
      %92 = dma.done [#allocation6], 128
    $region37: #{tpu_custom_call.1} parent=1 // pred_fallthru
      _
    // Predicated region
    $region38: #{tpu_custom_call.1} parent=1 // pred_check
      _
    $region39: #{tpu_custom_call.1} parent=1 // pred_check_branch
      %94 = sbr.rel (0) target = $region41
    $region40: #{tpu_custom_call.1} parent=1 // pred_region
      %96 = dma.done [#allocation6], 64
    $region41: #{tpu_custom_call.1} parent=1 // pred_fallthru
      _
    // Predicated region
    $region42: #{tpu_custom_call.1} parent=1 // pred_check
      _
    $region43: #{tpu_custom_call.1} parent=1 // pred_check_branch
      %98 = sbr.rel (0) target = $region45
    $region44: #{tpu_custom_call.1} parent=1 // pred_region
      %100 = dma.done [#allocation9], 64
    $region45: #{tpu_custom_call.1} parent=1 // pred_fallthru
      _
    // Predicated region
    $region46: #{tpu_custom_call.1} parent=1 // pred_check
      _
    $region47: #{tpu_custom_call.1} parent=1 // pred_check_branch
      %102 = sbr.rel (0) target = $region49
    $region48: #{tpu_custom_call.1} parent=1 // pred_region
      %104 = dma.done [#allocation9], 64
    $region49: #{tpu_custom_call.1} parent=1 // pred_fallthru
      _
    // Predicated region
    $region50: #{tpu_custom_call.1} parent=1 // pred_check
      _
    $region51: #{tpu_custom_call.1} parent=1 // pred_check_branch
      %106 = sbr.rel (0) target = $region53
    $region52: #{tpu_custom_call.1} parent=1 // pred_region
      %108 = dma.done [#allocation12], 64
    $region53: #{tpu_custom_call.1} parent=1 // pred_fallthru
      _
    %v109 = vld [vmem:[#allocation2] sm:$0xff]
    %vm110 = vcmp.ne.s32.totalorder %v109, 0
    %v111 = vld [vmem:[#allocation8] sm:$0xf]
    %v112 = vld [vmem:[#allocation7] sm:$0xf]
    %v114 = vperm.slane %v111, 0
    %v115 = vperm.slane %v111, 1
    %v116 = vperm.slane %v111, 2
    %v117 = vperm.slane %v111, 3
    %v119 = vperm.slane %v112, 0
    %v120 = vperm.slane %v112, 1
    %v121 = vperm.slane %v112, 2
    %v122 = vperm.slane %v112, 3
    %v123 = vrot.slane %v115, 6
    %v124 = vrot.slane %v116, 4
    %v125 = vrot.slane %v117, 2
    %vm126 = vcmask 1041408
    %v127 = vsel %vm126, %v114, %v123
    %vm128 = vcmask 1045508
    %v129 = vsel %vm128, %v124, %v125
    %vm130 = vcmask 1043456
    %v131 = vsel %vm130, %v127, %v129
    %v133 = vrot.slane %v120, 6
    %v134 = vrot.slane %v121, 4
    %v135 = vrot.slane %v122, 2
    %v136 = vsel %vm126, %v119, %v133
    %v137 = vsel %vm128, %v134, %v135
    %v138 = vsel %vm130, %v136, %v137
    %v140 = vsel %vm110, %v131, %v138
    %v141 = vld [vmem:[#allocation5] sm:$0xff]
    %v142 = vld [vmem:[#allocation10] sm:$0xf]
    %v144 = vperm.slane %v142, 0
    %v145 = vperm.slane %v142, 1
    %v146 = vperm.slane %v142, 2
    %v147 = vperm.slane %v142, 3
    %v148 = vrot.slane %v145, 6
    %v149 = vrot.slane %v146, 4
    %v150 = vrot.slane %v147, 2
    %v151 = vsel %vm126, %v144, %v148
    %v152 = vsel %vm128, %v149, %v150
    %v153 = vsel %vm130, %v151, %v152
    %v155 = vmul.f32 %v141, %v153
    %v156 = vld [vmem:[%s5] sm:$0xf]
    %v158 = vperm.slane %v156, 0
    %v159 = vperm.slane %v156, 1
    %v160 = vperm.slane %v156, 2
    %v161 = vperm.slane %v156, 3
    %v162 = vrot.slane %v159, 6
    %v163 = vrot.slane %v160, 4
    %v164 = vrot.slane %v161, 2
    %v165 = vsel %vm126, %v158, %v162
    %v166 = vsel %vm128, %v163, %v164
    %v167 = vsel %vm130, %v165, %v166
    %v169 = vmul.f32 %v155, %v167
    %v170 = vld [vmem:[#allocation11] sm:$0xf]
    %v172 = vperm.slane %v170, 0
    %v173 = vperm.slane %v170, 1
    %v174 = vperm.slane %v170, 2
    %v175 = vperm.slane %v170, 3
    %v176 = vrot.slane %v173, 6
    %v177 = vrot.slane %v174, 4
    %v178 = vrot.slane %v175, 2
    %v179 = vsel %vm126, %v172, %v176
    %v180 = vsel %vm128, %v177, %v178
    %v181 = vsel %vm130, %v179, %v180
    %v183 = vadd.f32 %v169, %v181
    %v184 = vand.u32 2147483647, %v183
    %vm185 = vcmp.le.f32.partialorder %v184, 0.7853982
    %vm186 = vcmp.lt.s32.totalorder %v183, 0
    %v187 = vand.u32 %v183, 2139095040
    %v188 = vshrl.u32 %v187, 23
    %v189 = vsub.s32 %v188, 127
    %v190 = vand.u32 2147483647, %v183
    %v191 = vand.u32 %v190, 8388607
    %v192 = vor.u32 %v191, 8388608
    %v193 = vsub.s32 0, %v192
    %v194 = vadd.s32 %v189, 1
    %vm195 = vcmp.gt.s32.totalorder %v194, 0
    %v196 = vsel %vm195, %v194, 0
    %v197 = vshrl.u32 %v196, 5
    %v198 = vand.u32 %v196, 31
    %v199 = vsub.s32 32, %v198
    %v200 = vshrl.u32 683565275, %v199
    %v201 = vshll.u32 683565275, %v198
    %v202 = vshrl.u32 2475754826, %v199
    %v203 = vor.u32 %v201, %v202
    %v204 = vshll.u32 2475754826, %v198
    %v205 = vshrl.u32 2131351028, %v199
    %v206 = vor.u32 %v204, %v205
    %v207 = vshll.u32 2131351028, %v198
    %v208 = vshrl.u32 2102212464, %v199
    %v209 = vor.u32 %v207, %v208
    %v210 = vshll.u32 2102212464, %v198
    %v211 = vshrl.u32 920167782, %v199
    %v212 = vor.u32 %v210, %v211
    %v213 = vshll.u32 920167782, %v198
    %v214 = vshrl.u32 1326507024, %v199
    %v215 = vor.u32 %v213, %v214
    %vm216 = vcmp.lt.s32.totalorder %v197, 1
    %vm217 = vcmp.lt.s32.totalorder %v197, 2
    %vm218 = vcmp.lt.s32.totalorder %v197, 3
    %vm219 = vcmp.lt.s32.totalorder %v197, 4
    %v220 = vsel %vm216, %v200, %v203
    %v221 = vsel %vm219, %v209, 2102212464
    %v222 = vsel %vm218, %v206, %v221
    %v223 = vsel %vm217, %v220, %v222
    %v224 = vsel %vm216, %v203, %v206
    %v225 = vsel %vm219, %v212, 920167782
    %v226 = vsel %vm218, %v209, %v225
    %v227 = vsel %vm217, %v224, %v226
    %v228 = vsel %vm216, %v206, %v209
    %v229 = vsel %vm219, %v215, 1326507024
    %v230 = vsel %vm218, %v212, %v229
    %v231 = vsel %vm217, %v228, %v230
    %v232 = vshll.u32 %v192, 8
    %v233 = vand.u32 %v232, 65535
    %v234 = vshrl.u32 %v232, 16
    %v235 = vand.u32 %v231, 65535
    %v236 = vshrl.u32 %v231, 16
    %v237 = vmul.u32 %v233, %v235
    %v238 = vmul.u32 %v233, %v236
    %v239 = vmul.u32 %v234, %v235
    %v240 = vmul.u32 %v234, %v236
    %v241 = vshll.u32 %v238, 16
    %v242 = vshrl.u32 %v238, 16
    %v243 = vshll.u32 %v239, 16
    %v244 = vshrl.u32 %v239, 16
    %vm245 = vc.u32 %v237, %v241
    %v246 = vsel %vm245, 1, 0
    %v247 = vadd.s32 %v237, %v241
    %v248 = vadd.s32 %v240, %v246
    %vm249 = vc.u32 %v247, %v243
    %v250 = vsel %vm249, 1, 0
    %v251 = vadd.s32 %v247, %v243
    %v252 = vadd.s32 %v248, %v250
    %v253 = vadd.s32 %v252, %v242
    %v254 = vadd.s32 %v253, %v244
    %v255 = vand.u32 %v232, 65535
    %v256 = vshrl.u32 %v232, 16
    %v257 = vand.u32 %v227, 65535
    %v258 = vshrl.u32 %v227, 16
    %v259 = vmul.u32 %v255, %v257
    %v260 = vmul.u32 %v255, %v258
    %v261 = vmul.u32 %v256, %v257
    %v262 = vmul.u32 %v256, %v258
    %v263 = vshll.u32 %v260, 16
    %v264 = vshrl.u32 %v260, 16
    %v265 = vshll.u32 %v261, 16
    %v266 = vshrl.u32 %v261, 16
    %vm267 = vc.u32 %v259, %v263
    %v268 = vsel %vm267, 1, 0
    %v269 = vadd.s32 %v259, %v263
    %v270 = vadd.s32 %v262, %v268
    %vm271 = vc.u32 %v269, %v265
    %v272 = vsel %vm271, 1, 0
    %v273 = vadd.s32 %v269, %v265
    %v274 = vadd.s32 %v270, %v272
    %v275 = vadd.s32 %v274, %v264
    %v276 = vadd.s32 %v275, %v266
    %v277 = vmul.u32 %v232, %v223
    %v278 = vadd.s32 %v254, %v273
    %vm279 = vc.u32 %v254, %v273
    %v280 = vadd.s32 %v276, 1
    %v281 = vsel %vm279, %v280, %v276
    %v282 = vadd.s32 %v277, %v281
    %v283 = vadd.s32 %v282, 536870912
    %v284 = vshrl.u32 %v283, 30
    %v285 = vshll.u32 %v284, 30
    %v286 = vsub.s32 %v282, %v285
    %vm287 = vcmp.lt.s32.totalorder %v286, 0
    %v288 = vsub.s32 0, %v286
    %v289 = vsel %vm287, %v288, %v286
    %v290 = vclz %v289
    %v291 = vsub.s32 %v290, 2
    %vm292 = vcmp.gt.s32.totalorder 0, %v291
    %v293 = vsel %vm292, 0, %v291
    %v294 = vsub.s32 32, %v293
    %v295 = vshll.u32 %v286, %v293
    %v296 = vshrl.u32 %v278, %v294
    %v297 = vor.u32 %v295, %v296
    %v298 = vsub.s32 4294967266, %v293
    %v299 = vadd.s32 %v298, 127
    %v300 = vshll.u32 %v299, 23
    %v301 = vor.u32 4788187, %v300
    %v302 = vand.u32 2147483647, %v301
    %v304 = vcvt.s32.f32 %v297
    %v305 = vmul.f32 %v304, %v302
    %v306 = vxor.u32 %v305, 2147483648
    %v307 = vsel %vm186, %v306, %v305
    %v308 = vsub.s32 4, %v284
    %v309 = vsel %vm186, %v308, %v284
    %v310 = vsel %vm185, %v183, %v307
    %v311 = vsel %vm185, 0, %v309
    %v312 = vmul.f32 %v310, %v310
    %v313 = vmul.f32 %v312, -0.001358992
    %v314 = vadd.f32 %v313, 0.041655596
    %v315 = vmul.f32 %v312, %v314
    %v316 = vadd.f32 %v315, -0.4999988
    %v317 = vmul.f32 %v312, %v316
    %v318 = vadd.f32 1.0, %v317
    %v319 = vmul.f32 %v310, %v310
    %v320 = vmul.f32 %v319, -0.00019511016
    %v321 = vadd.f32 %v320, 0.008332121
    %v322 = vmul.f32 %v319, %v321
    %v323 = vadd.f32 %v322, -0.16666654
    %v324 = vmul.f32 %v319, %v323
    %v325 = vadd.f32 %v324, 1.0
    %v326 = vmul.f32 %v325, %v310
    %vm327 = vweird.f32 %v183
    %v328 = vadd.s32 %v311, 3
    %v329 = vand.u32 %v328, 3
    %vm330 = vcmp.lt.s32.totalorder %v329, 2
    %vm331 = vcmp.eq.s32.totalorder %v329, 0
    %v332 = vxor.u32 %v326, 2147483648
    %v333 = vsel %vm331, %v318, %v332
    %vm334 = vcmp.eq.s32.totalorder %v329, 2
    %v335 = vxor.u32 %v318, 2147483648
    %v336 = vsel %vm334, %v335, %v326
    %v337 = vsel %vm330, %v333, %v336
    %v338 = vsel %vm327, nan, %v337
    %v339 = vadd.f32 %v140, %v338
    %340 = vst [vmem:[#allocation13] sm:$0xff] %v339
    // Predicated region
    $region54: #{tpu_custom_call.1} parent=1 // pred_check
      _
    $region55: #{tpu_custom_call.1} parent=1 // pred_check_branch
      %342 = sbr.rel (0) target = $region57
    $region56: #{tpu_custom_call.1} parent=1 // pred_region
      %344 = vsyncadd [#allocation4], 0
      %s346 = sshll.u32 [#allocation13], 4
      %s347 = int_to_ptr.vmem [resolvable:$true] %s346
      %s348 = sshll.u32 %s7, 4
      %s349 = int_to_ptr.hbm [resolvable:$true] %s348
      %351 = dma.vmem_to_hbm [thread:$0]  %s347, 128, %s349, [#allocation4]
    $region57: #{tpu_custom_call.1} parent=1 // pred_fallthru
      _
    // Predicated region
    $region58: #{tpu_custom_call.1} parent=1 // pred_check
      _
    $region59: #{tpu_custom_call.1} parent=1 // pred_check_branch
      %353 = sbr.rel (0) target = $region61
    $region60: #{tpu_custom_call.1} parent=1 // pred_region
      %355 = dma.done [#allocation4], 128
    $region61: #{tpu_custom_call.1} parent=1 // pred_fallthru
      _
    %356 = vsyncpa [#allocation3], 1
    %357 = vsyncpa [#allocation6], 1
    %358 = vsyncpa [#allocation9], 1
    %359 = vsyncpa [#allocation12], 1
    %360 = vsyncpa [#allocation4], 1

</llo_original>
